<compile_context>
chip_gen: v7x
topology: tpu7x:2x2x1
jax: 0.10.0
libtpu: 0.0.40
codegen_flags: <defaults>
</compile_context>

<pallas_src>
import functools

import jax
import jax.numpy as jnp
from jax.experimental import pallas as pl
from jax.experimental.pallas import tpu as pltpu


def _round_up(n: int, m: int) -> int:
    return ((n + m - 1) // m) * m


def sublayer_connection_kernel(*refs, eps: float, var_scale: float,
                               split_residual: bool):
    """One (TM, H) token tile x one (H, TN) weight column block.

    refs layout:
      split_residual=False: (x_ref, w_ref, b_ref, o_ref)
      split_residual=True : (x_ref, xr_ref, w_ref, b_ref, o_ref, y_ref)
        xr_ref: (TM, TN) column slice of x for the residual add
        y_ref : (TM, H) bf16 scratch holding the normalized tile, reused across j
    """
    if split_residual:
        x_ref, xr_ref, w_ref, b_ref, o_ref, y_ref = refs
    else:
        x_ref, w_ref, b_ref, o_ref = refs
        xr_ref = x_ref
        y_ref = None

    def normalized():
        xf = x_ref[...].astype(jnp.float32)
        mean = jnp.mean(xf, axis=-1, keepdims=True)
        c = xf - mean
        # torch.std is unbiased -> var = mean(c*c) * H/(H-1); eps added under the sqrt.
        var = jnp.mean(c * c, axis=-1, keepdims=True) * var_scale
        return c * jax.lax.rsqrt(var + eps)

    if split_residual:
        # LayerNorm stats + bf16 normalized tile computed once per row block at the
        # first column step, reused for the remaining column blocks.
        @pl.when(pl.program_id(1) == 0)
        def _():
            y_ref[...] = normalized().astype(y_ref.dtype)
        y = y_ref[...]
    else:
        y = normalized().astype(w_ref.dtype)

    # sublayer: Linear(H, H) column block on the MXU, f32 accumulate.
    # LayerNorm affine (a_2, b_2) is folded into w_ref / b_ref by the wrapper.
    sub = jnp.dot(y, w_ref[...], preferred_element_type=jnp.float32) + b_ref[...]

    # dropout (inference: identity) + residual.  Re-read x for the residual so the
    # full f32 upcast is not kept live across the MXU section.
    # TODO(synk): training-mode dropout mask via pltpu.prng_seed/prng_random_bits.
    o_ref[...] = (xr_ref[...].astype(jnp.float32) + sub).astype(o_ref.dtype)


def fold_sublayer_params(a2, b2, w, bias):
    """One-time fold of the LayerNorm affine into the Linear params.

    Hoisted out of the forward so the O(H^2) pass is paid once per weight update:
        W' = a_2[:, None] * W   (bf16 MXU operand)
        b' = b_2 @ W + bias     (f32)
    """
    a2f = a2.astype(jnp.float32)
    b2f = b2.astype(jnp.float32)
    wf = w.astype(jnp.float32)
    w_fold = (a2f[:, None] * wf).astype(jnp.bfloat16)
    b_fold = (b2f @ wf + bias.astype(jnp.float32)).reshape(1, -1)
    return w_fold, b_fold


def sublayer_connection_forward(x, w_fold, b_fold, *, eps=1e-6, tm=512, tn=None):
    """x: (B, S, H). Returns x + Linear(LayerNorm(x)) with inference-mode dropout.

    w_fold / b_fold come from fold_sublayer_params (computed once, reused per call).
    Output dtype == input dtype (bf16 activations stay bf16 in HBM).
    """
    B, S, H = x.shape
    N = B * S
    x2 = x.reshape(N, H)                      # metadata-only reshape, no HBM copy
    x_bytes = x2.dtype.itemsize
    out_bytes = x_bytes

    # ---- generation-aware VMEM budget (~75% of physical) ----
    try:
        vmem_cap = int(pltpu.get_tpu_info().vmem_capacity_bytes)
    except Exception:
        vmem_cap = 64 * 1024 * 1024           # conservative fallback (v7x per-TC)
    budget = (vmem_cap * 3) // 4

    # ---- weight column tiling (only when the full folded weight is too big) ----
    if tn is not None:
        TN = int(tn)
    elif H % 128 == 0 and H * H * 2 > budget // 2:
        TN = 128
        t = 128
        while t <= H:
            # double-buffered column slab must fit in half the budget
            if H % t == 0 and 2 * H * t * 2 <= budget // 2:
                TN = t
            t += 128
    else:
        TN = H
    assert H % TN == 0 and (TN == H or TN % 128 == 0), (H, TN)
    C = H // TN
    split_residual = C > 1

    # ---- VMEM accounting: resident weight single-buffered (pl.Buffered(1));
    #      column-tiled weight keeps the default double buffer for DMA overlap ----
    w_bufs = 1 if C == 1 else 2
    w_slab = H * TN * 2 * w_bufs              # bf16 folded weight
    b_slab = TN * 4 * w_bufs                  # f32 folded bias
    headroom = 2 * 1024 * 1024                # compiler-internal scratch / semaphores

    per_row = 2 * H * x_bytes + 2 * TN * out_bytes          # x + out, double-buffered
    if split_residual:
        per_row += 2 * TN * x_bytes + 2 * H                 # xr double-buffer + bf16 y scratch

    avail = budget - w_slab - b_slab - headroom
    tm_cap = max(avail // per_row, 8)
    TM = min(int(tm), int(tm_cap), _round_up(N, 8))
    if TM >= 128:
        TM = (TM // 128) * 128                # keep 128x128 MXU tiles full (v5e)
    TM = max((TM // 8) * 8, 8)
    R = pl.cdiv(N, TM)                        # ragged last block: writes masked by Pallas
    grid = (R, C)

    need = w_slab + b_slab + TM * per_row + headroom
    vmem_limit = int(min(max(need, 16 * 1024 * 1024), (vmem_cap * 9) // 10))

    # ---- specs ----
    x_spec = pl.BlockSpec((TM, H), lambda i, j: (i, 0))
    out_spec = pl.BlockSpec((TM, TN), lambda i, j: (i, j))
    if C == 1:
        # Resident weight/bias: single pipeline buffer (fetched once, index constant).
        w_spec = pl.BlockSpec((H, TN), lambda i, j: (0, j), pipeline_mode=pl.Buffered(1))
        b_spec = pl.BlockSpec((1, TN), lambda i, j: (0, j), pipeline_mode=pl.Buffered(1))
    else:
        w_spec = pl.BlockSpec((H, TN), lambda i, j: (0, j))
        b_spec = pl.BlockSpec((1, TN), lambda i, j: (0, j))

    if split_residual:
        xr_spec = pl.BlockSpec((TM, TN), lambda i, j: (i, j))
        in_specs = [x_spec, xr_spec, w_spec, b_spec]
        operands = (x2, x2, w_fold, b_fold)
        scratch_shapes = [pltpu.VMEM((TM, H), jnp.bfloat16)]
    else:
        in_specs = [x_spec, w_spec, b_spec]
        operands = (x2, w_fold, b_fold)
        scratch_shapes = []

    kernel = functools.partial(
        sublayer_connection_kernel,
        eps=float(eps),
        var_scale=float(H) / float(H - 1),
        split_residual=split_residual,
    )

    cost = pl.CostEstimate(
        flops=2 * N * H * H + 7 * N * H,
        transcendentals=N,                                    # one rsqrt per row
        bytes_accessed=int((2 if split_residual else 1) * N * H * x_bytes
                           + N * H * out_bytes + H * H * 2 + H * 4),
    )

    out = pl.pallas_call(
        kernel,
        out_shape=jax.ShapeDtypeStruct((N, H), x.dtype),
        grid_spec=pltpu.PrefetchScalarGridSpec(
            num_scalar_prefetch=0,
            grid=grid,
            in_specs=in_specs,
            out_specs=out_spec,
            scratch_shapes=scratch_shapes,
        ),
        compiler_params=pltpu.CompilerParams(
            dimension_semantics=("parallel", "arbitrary"),
            vmem_limit_bytes=vmem_limit,
        ),
        cost_estimate=cost,
    )(*operands)

    return out.reshape(B, S, H)


def sublayer_connection(x, a2, b2, w, bias, *, eps=1e-6, tm=512, tn=None):
    """Convenience wrapper (folds per call). Prefer fold_sublayer_params + forward."""
    w_fold, b_fold = fold_sublayer_params(a2, b2, w, bias)
    return sublayer_connection_forward(x, w_fold, b_fold, eps=eps, tm=tm, tn=tn)


# ----------------------------- references -----------------------------------

def _reference_exact(x, a2, b2, w, bias, eps=1e-6):
    """Mirrors the kernel math exactly (folded affine, bf16 MXU operands)."""
    H = x.shape[-1]
    xf = x.astype(jnp.float32)
    mean = jnp.mean(xf, axis=-1, keepdims=True)
    c = xf - mean
    var = jnp.mean(c * c, axis=-1, keepdims=True) * (H / (H - 1))
    y = c * jax.lax.rsqrt(var + eps)
    w_fold, b_fold = fold_sublayer_params(a2, b2, w, bias)
    sub = jnp.dot(y.astype(jnp.bfloat16), w_fold,
                  preferred_element_type=jnp.float32) + b_fold
    return (xf + sub).astype(x.dtype)


def _reference_module(x, a2, b2, w, bias, eps=1e-6):
    """Pure-f32 reference of the PyTorch module semantics."""
    H = x.shape[-1]
    xf = x.astype(jnp.float32)
    mean = jnp.mean(xf, axis=-1, keepdims=True)
    c = xf - mean
    var_unbiased = jnp.sum(c * c, axis=-1, keepdims=True) / (H - 1)
    normed = a2 * c / jnp.sqrt(var_unbiased + eps) + b2
    sub = normed @ w.astype(jnp.float32) + bias
    return (xf + sub).astype(x.dtype)


if __name__ == "__main__":
    root = jax.random.PRNGKey(0)

    def make_case(key, B, S, H):
        kx, ka, kb2, kw, kb = jax.random.split(key, 5)
        x = jax.random.normal(kx, (B, S, H), dtype=jnp.float32)
        a2 = 1.0 + 0.1 * jax.random.normal(ka, (H,), dtype=jnp.float32)
        b2 = 0.1 * jax.random.normal(kb2, (H,), dtype=jnp.float32)
        w = 0.05 * jax.random.normal(kw, (H, H), dtype=jnp.float32)
        bias = 0.01 * jax.random.normal(kb, (H,), dtype=jnp.float32)
        return x, a2, b2, w, bias

    def check(out, x, a2, b2, w, bias):
        assert out.shape == x.shape
        ref_e = _reference_exact(x, a2, b2, w, bias)
        assert jnp.allclose(out, ref_e, atol=2e-3, rtol=2e-3), \
            "mismatch vs exact (bf16-path) reference"
        ref_m = _reference_module(x, a2, b2, w, bias)
        assert jnp.allclose(out, ref_m, atol=2e-2, rtol=2e-2), \
            "mismatch vs f32 module reference"

    k1, k2, k3 = jax.random.split(root, 3)

    # Case 1: B=2, S=8, H=32 — resident single-buffered weight, multi-step token grid.
    x, a2, b2, w, bias = make_case(k1, 2, 8, 32)
    w_fold, b_fold = fold_sublayer_params(a2, b2, w, bias)     # hoisted one-time fold
    out = jax.block_until_ready(sublayer_connection_forward(x, w_fold, b_fold, tm=8))
    check(out, x, a2, b2, w, bias)

    # Case 2: B=2, S=9 — token count not a multiple of the tile: ragged last block,
    # no jnp.pad copy of the activations in HBM.
    x, a2, b2, w, bias = make_case(k2, 2, 9, 32)
    w_fold, b_fold = fold_sublayer_params(a2, b2, w, bias)
    out = jax.block_until_ready(sublayer_connection_forward(x, w_fold, b_fold, tm=8))
    check(out, x, a2, b2, w, bias)

    # Case 3: H=256 with tn=128 forced — exercises the weight-column-tiled path
    # (large-H / v7x regime) at a small shape: 2D grid, pl.when-guarded LN scratch.
    x, a2, b2, w, bias = make_case(k3, 2, 8, 256)
    w_fold, b_fold = fold_sublayer_params(a2, b2, w, bias)
    out = jax.block_until_ready(
        sublayer_connection_forward(x, w_fold, b_fold, tm=8, tn=128))
    check(out, x, a2, b2, w, bias)

    print("KERNEL_OK")
</pallas_src>

<mosaic_0001>
module attributes {stable_mosaic.version = 11 : i64} {
  func.func @sublayer_connection_kernel(%arg0: i32, %arg1: i32, %arg2: memref<8x32xf32, #tpu.memory_space<vmem>>, %arg3: memref<32x32xbf16, #tpu.memory_space<vmem>>, %arg4: memref<1x32xf32, #tpu.memory_space<vmem>>, %arg5: memref<8x32xf32, #tpu.memory_space<vmem>>) attributes {dimension_semantics = [#tpu.dimension_semantics<parallel>, #tpu.dimension_semantics<arbitrary>], iteration_bounds = array<i64: 2, 1>, scalar_prefetch = 0 : i64, scratch_operands = 0 : i64, tpu.core_type = #tpu.core_type<tc>, window_params = [{transform_indices = @transform_0, window_bounds = array<i64: 8, 32>}, {pipeline_mode = #tpu.pipeline_mode<synchronous>, transform_indices = @transform_1, window_bounds = array<i64: 32, 32>}, {pipeline_mode = #tpu.pipeline_mode<synchronous>, transform_indices = @transform_2, window_bounds = array<i64: 1, 32>}, {transform_indices = @transform_3, window_bounds = array<i64: 8, 32>}]} {
    %c0 = arith.constant 0 : index
    %c0_0 = arith.constant 0 : index
    %0 = vector.load %arg2[%c0, %c0_0] : memref<8x32xf32, #tpu.memory_space<vmem>>, vector<8x32xf32>
    %cst = arith.constant dense<0.000000e+00> : vector<8xf32>
    %1 = vector.multi_reduction <add>, %0, %cst [1] : vector<8x32xf32> to vector<8xf32>
    %2 = vector.shape_cast %1 : vector<8xf32> to vector<8x1xf32>
    %cst_1 = arith.constant 3.200000e+01 : f32
    %3 = vector.broadcast %cst_1 : f32 to vector<8x1xf32>
    %4 = arith.divf %2, %3 : vector<8x1xf32>
    %5 = vector.broadcast %4 : vector<8x1xf32> to vector<8x32xf32>
    %6 = arith.subf %0, %5 : vector<8x32xf32>
    %7 = arith.mulf %6, %6 : vector<8x32xf32>
    %cst_2 = arith.constant dense<0.000000e+00> : vector<8xf32>
    %8 = vector.multi_reduction <add>, %7, %cst_2 [1] : vector<8x32xf32> to vector<8xf32>
    %9 = vector.shape_cast %8 : vector<8xf32> to vector<8x1xf32>
    %cst_3 = arith.constant 3.200000e+01 : f32
    %10 = vector.broadcast %cst_3 : f32 to vector<8x1xf32>
    %11 = arith.divf %9, %10 : vector<8x1xf32>
    %cst_4 = arith.constant 1.03225803 : f32
    %12 = vector.broadcast %cst_4 : f32 to vector<8x1xf32>
    %13 = arith.mulf %11, %12 : vector<8x1xf32>
    %cst_5 = arith.constant 9.99999997E-7 : f32
    %14 = vector.broadcast %cst_5 : f32 to vector<8x1xf32>
    %15 = arith.addf %13, %14 : vector<8x1xf32>
    %16 = math.rsqrt %15 : vector<8x1xf32>
    %17 = vector.broadcast %16 : vector<8x1xf32> to vector<8x32xf32>
    %18 = arith.mulf %6, %17 : vector<8x32xf32>
    %19 = arith.truncf %18 : vector<8x32xf32> to vector<8x32xbf16>
    %c0_6 = arith.constant 0 : index
    %c0_7 = arith.constant 0 : index
    %20 = vector.load %arg3[%c0_6, %c0_7] : memref<32x32xbf16, #tpu.memory_space<vmem>>, vector<32x32xbf16>
    %cst_8 = arith.constant dense<0.000000e+00> : vector<8x32xf32>
    %21 = tpu.matmul %19, %20, %cst_8 {dimension_numbers = #tpu.dot_dimension_numbers<[1], [0], [0], [1], [0, 0, 1, 1], [], []>} : vector<8x32xbf16>, vector<32x32xbf16>, vector<8x32xf32> -> vector<8x32xf32>
    %c0_9 = arith.constant 0 : index
    %c0_10 = arith.constant 0 : index
    %22 = vector.load %arg4[%c0_9, %c0_10] : memref<1x32xf32, #tpu.memory_space<vmem>>, vector<1x32xf32>
    %23 = vector.broadcast %22 : vector<1x32xf32> to vector<8x32xf32>
    %24 = arith.addf %21, %23 : vector<8x32xf32>
    %c0_11 = arith.constant 0 : index
    %c0_12 = arith.constant 0 : index
    %25 = vector.load %arg2[%c0_11, %c0_12] : memref<8x32xf32, #tpu.memory_space<vmem>>, vector<8x32xf32>
    %26 = arith.addf %25, %24 : vector<8x32xf32>
    %c0_13 = arith.constant 0 : index
    %c0_14 = arith.constant 0 : index
    %27 = vector.load %arg5[%c0_13, %c0_14] : memref<8x32xf32, #tpu.memory_space<vmem>>, vector<8x32xf32>
    tpu.vector_store %arg5[%c0_13, %c0_14], %26 {strides = array<i32>} : memref<8x32xf32, #tpu.memory_space<vmem>>, vector<8x32xf32>,
    return
  }
  func.func @transform_0(%arg0: i32, %arg1: i32) -> (i32, i32) {
    %c0_i32 = arith.constant 0 : i32
    %c0_i32_0 = arith.constant 0 : i32
    return %arg0, %c0_i32 : i32, i32
  }
  func.func @transform_1(%arg0: i32, %arg1: i32) -> (i32, i32) {
    %c0_i32 = arith.constant 0 : i32
    %c0_i32_0 = arith.constant 0 : i32
    return %c0_i32, %arg1 : i32, i32
  }
  func.func @transform_2(%arg0: i32, %arg1: i32) -> (i32, i32) {
    %c0_i32 = arith.constant 0 : i32
    %c0_i32_0 = arith.constant 0 : i32
    return %c0_i32, %arg1 : i32, i32
  }
  func.func @transform_3(%arg0: i32, %arg1: i32) -> (i32, i32) {
    %c0_i32 = arith.constant 0 : i32
    return %arg0, %arg1 : i32, i32
  }
}

</mosaic_0001>

<llo_original>
// kernel: tpu_custom_call.1
$region0: #{tpu_custom_call.1}
  #allocation0 [shape = 'u32[]', space=smem, size = 0x4, offset = 0x4, fixed_abs, tag = 'smem constant byte address 0x4 - core index']
  #allocation1 [shape = 'u32[144,128]{1,0:T(1,128)}', space=vmem, size = 0x12000, scoped, tag = 'internal scratch']
  %s0 = inlined_call_operand.hbm [shape: f32[16,32], index: 0, kind: input, shape index: {}]
  %s1 = inlined_call_operand.hbm [shape: bf16[32,32], index: 1, kind: input, shape index: {}]
  %s2 = inlined_call_operand.vmem [shape: f32[1,32], index: 2, kind: input, shape index: {}]
  %s3 = inlined_call_operand.hbm [shape: f32[16,32], index: 3, kind: output, shape index: {}]
  %s4 = sld [smem:[#allocation0]]
  $region53: #{tpu_custom_call.1} parent=0
    _
  %s6 = ssub.s32 1, %s4
  %s7 = scalar_select 0, %s6, %s4
  $region1: #{tpu_custom_call.1} parent=0
    #allocation2 [shape = 'u8[8192]{0}', space=vmem, size = 0x2000, scoped, tag = 'input window, operand 0']
    #allocation3 [shape = 's32[2]{0}', space=sflag, size = 0x8, scoped, tag = 'scoped memory for tpu_custom_call.1']
    #allocation4 [shape = 's32[2]{0}', space=sflag, size = 0x8, scoped, tag = 'scoped memory for tpu_custom_call.1']
    #allocation5 [shape = 'u8[8192]{0}', space=vmem, size = 0x2000, scoped, tag = 'input window, operand 1, single buffered']
    #allocation6 [shape = 's32[1]{0}', space=sflag, size = 0x4, scoped, tag = 'scoped memory for tpu_custom_call.1']
    #allocation7 [shape = 'u8[8192]{0}', space=vmem, size = 0x2000, scoped, tag = 'output window, operand 0']
    %8 = vsyncpa [#allocation3], 0
    %s9 = scalar_lea.sflag [#allocation3], 1
    %10 = vsyncpa %s9, 0
    %11 = vsyncpa [#allocation6], 0
    %12 = vsyncpa [#allocation4], 0
    %s13 = scalar_lea.sflag [#allocation4], 1
    %14 = vsyncpa %s13, 0
    loop: start=0, step=1, limit=4
    $region2: #{tpu_custom_call.1} parent=1 // loop_pre_header
      _
    $region3: #{tpu_custom_call.1} parent=1 // loop_header
      %s16 = sphi 0, %s20
      %p17 = scmp.ge.s32.totalorder %s16, 4
      %s23 = sphi 0, %s35
      %s24 = sphi 0, %s31
      %s25 = sphi 0, %s23
      %s26 = sphi 0, %s24
      %s27 = sphi 0, %s25
      %s28 = sphi 0, %s26
      %s38 = sphi 0, %s40
      %s41 = sphi 0, %s38
      %s42 = sphi 0, %s41
      %s58 = sphi 0, %s42
      %s64 = sphi 0, %s66
      %s67 = sphi 0, %s64
      %s68 = sphi 0, %s67
      %s84 = sphi 0, %s68
      %s90 = sphi 0, %s92
      %s93 = sphi 0, %s90
      %s94 = sphi 0, %s93
      %s110 = sphi 0, %s94
      %s118 = sphi 0, %s120
      %s121 = sphi 0, %s118
      %s122 = sphi 0, %s121
      %s138 = sphi 0, %s122
    $region4: #{tpu_custom_call.1} parent=1 // loop_header_branch
      %19 = sbr.rel (%p17) target = $region8
    $region5: #{tpu_custom_call.1} parent=1 // loop_body
      %s21 = ssub.s32 %s16, 1
      %s22 = ssub.s32 %s16, 2
      %s29 = sadd.s32 1, %s24
      %p30 = scmp.ge.s32.totalorder %s29, 1
      %s31 = scalar_select %p30, 0, %s29
      %s32 = sadd.s32 1, %s23
      %s33 = scalar_select %p30, %s32, %s23
      %p34 = scmp.ge.s32.totalorder %s33, 2
      %s35 = scalar_select %p34, 0, %s33
      %s36 = ssub.s32 %s23, %s35
      %p37 = scmp.eq.s32.totalorder %s36, 0
      %s39 = sadd.s32 %s38, 1
      %s40 = scalar_select %p37, %s38, %s39
      %p43 = pneg %p37
      %p44 = scmp.eq.s32.totalorder %s16, 1
      %p45 = por %p43, %p44
      %p46 = scmp.ne.s32.totalorder %s38, %s41
      %p47 = scmp.eq.s32.totalorder %s16, 0
      %p48 = por %p46, %p47
      %p49 = scmp.ne.s32.totalorder %s38, %s41
      %p50 = scmp.eq.s32.totalorder %s21, 1
      %p51 = por %p49, %p50
      %p52 = scmp.ne.s32.totalorder %s41, %s42
      %p53 = scmp.eq.s32.totalorder %s21, 0
      %p54 = por %p52, %p53
      %p55 = scmp.ne.s32.totalorder %s41, %s42
      %p56 = scmp.eq.s32.totalorder %s22, 1
      %p57 = por %p55, %p56
      %p59 = scmp.ne.s32.totalorder %s42, %s58
      %p60 = scmp.eq.s32.totalorder %s22, 0
      %p61 = por %p59, %p60
      %s62 = ssub.s32 %s24, %s31
      %p63 = scmp.eq.s32.totalorder %s62, 0
      %s65 = sadd.s32 %s64, 1
      %s66 = scalar_select %p63, %s64, %s65
      %p69 = pneg %p63
      %p70 = scmp.eq.s32.totalorder %s16, 1
      %p71 = por %p69, %p70
      %p72 = scmp.ne.s32.totalorder %s64, %s67
      %p73 = scmp.eq.s32.totalorder %s16, 0
      %p74 = por %p72, %p73
      %p75 = scmp.ne.s32.totalorder %s64, %s67
      %p76 = scmp.eq.s32.totalorder %s21, 1
      %p77 = por %p75, %p76
      %p78 = scmp.ne.s32.totalorder %s67, %s68
      %p79 = scmp.eq.s32.totalorder %s21, 0
      %p80 = por %p78, %p79
      %p81 = scmp.ne.s32.totalorder %s67, %s68
      %p82 = scmp.eq.s32.totalorder %s22, 1
      %p83 = por %p81, %p82
      %p85 = scmp.ne.s32.totalorder %s68, %s84
      %p86 = scmp.eq.s32.totalorder %s22, 0
      %p87 = por %p85, %p86
      %s88 = ssub.s32 %s24, %s31
      %p89 = scmp.eq.s32.totalorder %s88, 0
      %s91 = sadd.s32 %s90, 1
      %s92 = scalar_select %p89, %s90, %s91
      %p95 = pneg %p89
      %p96 = scmp.eq.s32.totalorder %s16, 1
      %p97 = por %p95, %p96
      %p98 = scmp.ne.s32.totalorder %s90, %s93
      %p99 = scmp.eq.s32.totalorder %s16, 0
      %p100 = por %p98, %p99
      %p101 = scmp.ne.s32.totalorder %s90, %s93
      %p102 = scmp.eq.s32.totalorder %s21, 1
      %p103 = por %p101, %p102
      %p104 = scmp.ne.s32.totalorder %s93, %s94
      %p105 = scmp.eq.s32.totalorder %s21, 0
      %p106 = por %p104, %p105
      %p107 = scmp.ne.s32.totalorder %s93, %s94
      %p108 = scmp.eq.s32.totalorder %s22, 1
      %p109 = por %p107, %p108
      %p111 = scmp.ne.s32.totalorder %s94, %s110
      %p112 = scmp.eq.s32.totalorder %s22, 0
      %p113 = por %p111, %p112
      %s114 = ssub.s32 %s23, %s35
      %s115 = ssub.s32 %s24, %s31
      %s116 = sor.u32 %s114, %s115
      %p117 = scmp.eq.s32.totalorder %s116, 0
      %s119 = sadd.s32 %s118, 1
      %s120 = scalar_select %p117, %s118, %s119
      %p123 = pneg %p117
      %p124 = scmp.eq.s32.totalorder %s16, 1
      %p125 = por %p123, %p124
      %p126 = scmp.ne.s32.totalorder %s118, %s121
      %p127 = scmp.eq.s32.totalorder %s16, 0
      %p128 = por %p126, %p127
      %p129 = scmp.ne.s32.totalorder %s118, %s121
      %p130 = scmp.eq.s32.totalorder %s21, 1
      %p131 = por %p129, %p130
      %p132 = scmp.ne.s32.totalorder %s121, %s122
      %p133 = scmp.eq.s32.totalorder %s21, 0
      %p134 = por %p132, %p133
      %p135 = scmp.ne.s32.totalorder %s121, %s122
      %p136 = scmp.eq.s32.totalorder %s22, 1
      %p137 = por %p135, %p136
      %p139 = scmp.ne.s32.totalorder %s122, %s138
      %p140 = scmp.eq.s32.totalorder %s22, 0
      %p141 = por %p139, %p140
      %p142 = scmp.le.s32.totalorder 1, %s16
      %p143 = scmp.lt.s32.totalorder %s16, 3
      %p144 = pnand %p142, %p143
      %p145 = pneg %p144
      // Predicated region
      $region9: #{tpu_custom_call.1} parent=5 // pred_check
        _
      $region10: #{tpu_custom_call.1} parent=5 // pred_check_branch
        %147 = sbr.rel (%p144) target = $region12
      $region11: #{tpu_custom_call.1} parent=5 // pred_region
        %s148 = ssub.s32 %s16, 1
        // Predicated region
        $region13: #{tpu_custom_call.1} parent=11 // pred_check
          %p149 = pneg %p80
        $region14: #{tpu_custom_call.1} parent=11 // pred_check_branch
          %151 = sbr.rel (%p149) target = $region16
        $region15: #{tpu_custom_call.1} parent=11 // pred_region
          %s153 = ssub.s32 256, 256
          %154 = vsyncadd [#allocation6], %s153
          %s155 = smul.addr %s26, 64
          %s156 = scalar_lea.hbm %s1, %s155
          %s157 = sshll.u32 [#allocation5], 4
          %s158 = int_to_ptr.vmem [resolvable:$true] %s157
          %163 = dma.hbm_to_vmem [thread:$0]  %s156, 256, %s158, [#allocation6], 64, 64, 4
        $region16: #{tpu_custom_call.1} parent=11 // pred_fallthru
          _
        // Predicated region
        $region17: #{tpu_custom_call.1} parent=11 // pred_check
          %p164 = pneg %p106
        $region18: #{tpu_custom_call.1} parent=11 // pred_check_branch
          %166 = sbr.rel (%p164) target = $region20
        $region19: #{tpu_custom_call.1} parent=11 // pred_region
          %p167 = scmp.lt.s32.totalorder %s26, 0
          %s168 = scalar_select %p167, %s26, 0
          %s169 = scalar_lea.vmem %s2, %s168
        $region20: #{tpu_custom_call.1} parent=11 // pred_fallthru
          _
      $region12: #{tpu_custom_call.1} parent=5 // pred_fallthru
        _
      %p170 = scmp.lt.s32.totalorder %s16, 2
      // Predicated region
      $region21: #{tpu_custom_call.1} parent=5 // pred_check
        %p171 = pneg %p170
      $region22: #{tpu_custom_call.1} parent=5 // pred_check_branch
        %173 = sbr.rel (%p171) target = $region24
      $region23: #{tpu_custom_call.1} parent=5 // pred_region
        // Predicated region
        $region25: #{tpu_custom_call.1} parent=23 // pred_check
          %p174 = pneg %p48
        $region26: #{tpu_custom_call.1} parent=23 // pred_check_branch
          %176 = sbr.rel (%p174) target = $region28
        $region27: #{tpu_custom_call.1} parent=23 // pred_region
          %s177 = sand.u32 %s38, 1
          %s178 = scalar_lea.sflag [#allocation3], %s177
          %s179 = sand.u32 %s38, 1
          %s180 = smul.addr %s179, 8
          %s181 = scalar_lea.vmem [#allocation2], %s180
          %s183 = ssub.s32 128, 128
          %184 = vsyncadd %s178, %s183
          %s185 = smul.addr %s23, 128
          %s186 = scalar_lea.hbm %s0, %s185
          %s188 = sshll.u32 %s181, 4
          %s189 = int_to_ptr.vmem [resolvable:$true] %s188
          %191 = dma.hbm_to_vmem [thread:$0]  %s186, 128, %s189, %s178
        $region28: #{tpu_custom_call.1} parent=23 // pred_fallthru
          _
      $region24: #{tpu_custom_call.1} parent=5 // pred_fallthru
        _
      %p192 = scmp.le.s32.totalorder 1, %s16
      %p193 = scmp.lt.s32.totalorder %s16, 3
      %p194 = pnand %p192, %p193
      %p195 = pneg %p194
      // Predicated region
      $region29: #{tpu_custom_call.1} parent=5 // pred_check
        _
      $region30: #{tpu_custom_call.1} parent=5 // pred_check_branch
        %197 = sbr.rel (%p194) target = $region32
      $region31: #{tpu_custom_call.1} parent=5 // pred_region
        %s198 = ssub.s32 %s16, 1
        %s199 = sand.u32 %s41, 1
        %s200 = scalar_lea.sflag [#allocation3], %s199
        %s201 = sand.u32 %s41, 1
        %s202 = smul.addr %s201, 8
        %s203 = scalar_lea.vmem [#allocation2], %s202
        // Predicated region
        $region33: #{tpu_custom_call.1} parent=31 // pred_check
          %p204 = pneg %p54
        $region34: #{tpu_custom_call.1} parent=31 // pred_check_branch
          %206 = sbr.rel (%p204) target = $region36
        $region35: #{tpu_custom_call.1} parent=31 // pred_region
          %207 = dma.done %s200, 128
        $region36: #{tpu_custom_call.1} parent=31 // pred_fallthru
          _
        // Predicated region
        $region37: #{tpu_custom_call.1} parent=31 // pred_check
          %p208 = pneg %p80
        $region38: #{tpu_custom_call.1} parent=31 // pred_check_branch
          %210 = sbr.rel (%p208) target = $region40
        $region39: #{tpu_custom_call.1} parent=31 // pred_region
          %211 = dma.done [#allocation6], 256
        $region40: #{tpu_custom_call.1} parent=31 // pred_fallthru
          _
        %s212 = sand.u32 %s41, 1
        %s213 = scalar_lea.sflag [#allocation3], %s212
        %s214 = sand.u32 %s41, 1
        %s215 = smul.addr %s214, 8
        %s216 = scalar_lea.vmem [#allocation2], %s215
        %p217 = pneg %p54
        %p218 = pneg %p51
        %p219 = pneg %p80
        %p220 = pneg %p77
        %p221 = scmp.lt.s32.totalorder %s26, 0
        %s222 = scalar_select %p221, %s26, 0
        %s223 = scalar_lea.vmem %s2, %s222
        %p224 = pneg %p106
        %p225 = pneg %p103
        %p226 = pneg %p134
        %p227 = pneg %p131
        %s228 = sand.u32 %s121, 1
        %s229 = scalar_lea.sflag [#allocation4], %s228
        %s230 = sand.u32 %s121, 1
        %s231 = smul.addr %s230, 8
        %s232 = scalar_lea.vmem [#allocation7], %s231
        %p233 = scmp.lt.s32.totalorder %s26, 0
        %s234 = scalar_select %p233, %s26, 0
        %s235 = scalar_lea.vmem %s2, %s234
        %v237 = vld [vmem:[%s203] sm:$0xff]
        %vm238 = vcmask 261120
        %v239 = vsel %vm238, %v237, 0.0
        %240 = vadd.xlane.f32.xlu0 %v239
        %v241 = vpop.xlane.xlu0 %240
        %v242 = vrcp.pop 32.0
        %v243 = vmul.f32 %v241, %v242
        %v244 = vsub.f32 %v237, %v243
        %v245 = vmul.f32 %v244, %v244
        %v246 = vsel %vm238, %v245, 0.0
        %247 = vadd.xlane.f32.xlu0 %v246
        %v248 = vpop.xlane.xlu0 %247
        %v249 = vmul.f32 %v248, %v242
        %v250 = vmul.f32 %v249, 1.032258
        %v251 = vadd.f32 %v250, 1e-06
        %v252 = vrsqrt.pop %v251
        %v253 = vmul.f32 %v244, %v252
        %v254 = vpack.c.bf16 %v253, %v253
        %v255 = vld [vmem:[#allocation5] sm:$0xf]
        %v256 = vld [vmem:[#allocation5 + $0x4] sm:$0xf]
        %v257 = vld [vmem:[#allocation5 + $0x8] sm:$0xf]
        %v258 = vld [vmem:[#allocation5 + $0xc] sm:$0xf]
        %v259 = vld [vmem:[%s235] sm:$0x1]
        %v261 = vlaneseq
        %v262 = vshrl.u32 %v261, 7
        %v263 = vsub.s32 0, %v262
        %v264 = vrot.slane %v259, %v263
        %v270 = vunpack.c.l.b16 %v255
        %v271 = vunpack.c.l.b16 %v256
        %v272 = vunpack.c.l.b16 %v257
        %v273 = vunpack.c.l.b16 %v258
        %v274 = vpack.c.b16 %v271, %v270
        %v275 = vpack.c.b16 %v273, %v272
        %v279 = vsel %vm238, %v254, 0
        %281 = vmatprep.subr.bf16.mxu0 0
        %282 = vmatpush1.bf16.msra.mxu0 %v274
        %283 = vmatprep.subr.bf16.mxu0 0
        %284 = vmatpush1.bf16.msra.mxu0 %v275
        %285 = vmatprep.subr.bf16.mxu0 0
        %286 = vmatpush1.bf16.msra.mxu0 0
        %287 = vmatprep.subr.bf16.mxu0 0
        %288 = vmatpush1.bf16.msra.mxu0 0
        %289 = vmatprep.subr.bf16.mxu0 0
        %290 = vmatpush1.bf16.msra.mxu0 0
        %291 = vmatprep.subr.bf16.mxu0 0
        %292 = vmatpush1.bf16.msra.mxu0 0
        %293 = vmatprep.subr.bf16.mxu0 0
        %294 = vmatpush1.bf16.msra.mxu0 0
        %295 = vmatprep.subr.bf16.mxu0 0
        %296 = vmatpush1.bf16.msra.mxu0 0
        %297 = vmatprep.subr.bf16.mxu0 0
        %298 = vmatpush1.bf16.msra.mxu0 0
        %299 = vmatprep.subr.bf16.mxu0 0
        %300 = vmatpush1.bf16.msra.mxu0 0
        %301 = vmatprep.subr.bf16.mxu0 0
        %302 = vmatpush1.bf16.msra.mxu0 0
        %303 = vmatprep.subr.bf16.mxu0 0
        %304 = vmatpush1.bf16.msra.mxu0 0
        %305 = vmatprep.subr.bf16.mxu0 0
        %306 = vmatpush1.bf16.msra.mxu0 0
        %307 = vmatprep.subr.bf16.mxu0 0
        %308 = vmatpush1.bf16.msra.mxu0 0
        %309 = vmatprep.subr.bf16.mxu0 0
        %310 = vmatpush1.bf16.msra.mxu0 0
        %311 = vmatprep.subr.bf16.mxu0 0
        %312 = vmatpush1.bf16.msra.mxu0 0
        %313 = vmatprep.mubr.bf16.mxu0 0
        %314 = vmatmul.mubr.bf16.gmra.mrb[0].mxu0 %v279
        %v315 = vpop.f32.mrb[0].mxu0
        %v316 = vadd.f32 %v264, %v315
        %v317 = vpop.f32.mrb[0].mxu0
        %v318 = vpop.f32.mrb[0].mxu0
        %v319 = vpop.f32.mrb[0].mxu0
        %320 = vdwg.mxu0
        %v321 = vadd.f32 %v237, %v316
        %322 = vst.msk [vmem:[%s232] sm:$0xff] %vm238, %v321
        %s323 = sand.u32 %s121, 1
        %s324 = scalar_lea.sflag [#allocation4], %s323
        %s325 = sand.u32 %s121, 1
        %s326 = smul.addr %s325, 8
        %s327 = scalar_lea.vmem [#allocation7], %s326
        // Predicated region
        $region41: #{tpu_custom_call.1} parent=31 // pred_check
          %p328 = pneg %p131
        $region42: #{tpu_custom_call.1} parent=31 // pred_check_branch
          %330 = sbr.rel (%p328) target = $region44
        $region43: #{tpu_custom_call.1} parent=31 // pred_region
          %s332 = ssub.s32 128, 128
          %333 = vsyncadd %s324, %s332
          %s334 = sadd.s32 %s26, %s25
          %s335 = smul.addr %s334, 128
          %s336 = scalar_lea.hbm %s3, %s335
          %s338 = sshll.u32 %s327, 4
          %s339 = int_to_ptr.vmem [resolvable:$true] %s338
          %341 = dma.vmem_to_hbm [thread:$0]  %s339, 128, %s336, %s324
        $region44: #{tpu_custom_call.1} parent=31 // pred_fallthru
          _
      $region32: #{tpu_custom_call.1} parent=5 // pred_fallthru
        _
      %p342 = scmp.le.s32.totalorder 2, %s16
      // Predicated region
      $region45: #{tpu_custom_call.1} parent=5 // pred_check
        %p343 = pneg %p342
      $region46: #{tpu_custom_call.1} parent=5 // pred_check_branch
        %345 = sbr.rel (%p343) target = $region48
      $region47: #{tpu_custom_call.1} parent=5 // pred_region
        %s346 = ssub.s32 %s16, 2
        // Predicated region
        $region49: #{tpu_custom_call.1} parent=47 // pred_check
          %p347 = pneg %p137
        $region50: #{tpu_custom_call.1} parent=47 // pred_check_branch
          %349 = sbr.rel (%p347) target = $region52
        $region51: #{tpu_custom_call.1} parent=47 // pred_region
          %s350 = sand.u32 %s122, 1
          %s351 = scalar_lea.sflag [#allocation4], %s350
          %s352 = sand.u32 %s122, 1
          %s353 = smul.addr %s352, 8
          %s354 = scalar_lea.vmem [#allocation7], %s353
          %355 = dma.done %s351, 128
        $region52: #{tpu_custom_call.1} parent=47 // pred_fallthru
          _
      $region48: #{tpu_custom_call.1} parent=5 // pred_fallthru
        _
    $region6: #{tpu_custom_call.1} parent=1 // loop_footer
      %s20 = sadd.s32 1, %s16
    $region7: #{tpu_custom_call.1} parent=1 // loop_footer_branch
      %15 = sbr.rel target = $region3
    $region8: #{tpu_custom_call.1} parent=1 // loop_exit
      _
    %356 = vsyncpa [#allocation3], 1
    %s357 = scalar_lea.sflag [#allocation3], 1
    %358 = vsyncpa %s357, 1
    %359 = vsyncpa [#allocation6], 1
    %360 = vsyncpa [#allocation4], 1
    %s361 = scalar_lea.sflag [#allocation4], 1
    %362 = vsyncpa %s361, 1

</llo_original>
